<compile_context>
chip_gen: v6e
topology: v6e:2x2x1
jax: 0.10.0
libtpu: 0.0.40
codegen_flags: <defaults>
</compile_context>

<pallas_src>
import functools
import math

import jax
import jax.numpy as jnp
import numpy as np
from jax.experimental import pallas as pl
from jax.experimental.pallas import tpu as pltpu

LANES = 128
_UNROLL_C_MAX = 32          # Python-unroll the channel loop up to this C


def _focal_kernel(x_ref, t_ref, nll_ref, fw_ref, *, C, gamma, lo, hi,
                  t_s, L, n_sb, last_rows, need_fw):
    """One (batch n, spatial block j) grid step.

    x_ref:  (1, C, t_s, L) logits (input dtype)
    t_ref:  (1, t_s, L)    int32 targets
    nll_ref, fw_ref: (1, 1, L) f32 lane-dense partial-sum accumulators,
                     VMEM-resident across the j axis.
    """
    j = pl.program_id(1)

    @pl.when(j == 0)
    def _init():
        nll_ref[...] = jnp.zeros_like(nll_ref)
        fw_ref[...] = jnp.zeros_like(fw_ref)

    def compute(masked):
        t = t_ref[0]                                   # (t_s, L) int32

        def load(c):
            return x_ref[0, c].astype(jnp.float32)     # (t_s, L)

        # Streaming per-channel passes: only (t_s, L)-sized temporaries.
        if C <= _UNROLL_C_MAX:
            m = load(0)
            for c in range(1, C):
                m = jnp.maximum(m, load(c))
            s = jnp.zeros((t_s, L), jnp.float32)
            x_t = jnp.zeros((t_s, L), jnp.float32)
            for c in range(C):
                xc = load(c)
                s = s + jnp.exp(xc - m)
                x_t = x_t + jnp.where(t == c, xc, 0.0)
        else:
            m = jax.lax.fori_loop(
                1, C,
                lambda c, m: jnp.maximum(m, x_ref[0, c].astype(jnp.float32)),
                load(0))

            def body(c, carry):
                s, x_t = carry
                xc = x_ref[0, c].astype(jnp.float32)
                return s + jnp.exp(xc - m), x_t + jnp.where(t == c, xc, 0.0)

            s, x_t = jax.lax.fori_loop(
                0, C, body,
                (jnp.zeros((t_s, L), jnp.float32),
                 jnp.zeros((t_s, L), jnp.float32)))

        lse = m + jnp.log(s)
        # -log(clip(softmax_t, eps, 1-eps)) computed directly in log space.
        neg_log = jnp.clip(lse - x_t, lo, hi)

        if need_fw:
            p_t = jnp.exp(-neg_log)                    # == clipped softmax_t
            one_minus = 1.0 - p_t
            if float(gamma).is_integer() and 0 < int(gamma) <= 8:
                fw = one_minus
                for _ in range(int(gamma) - 1):
                    fw = fw * one_minus
            else:
                fw = one_minus ** gamma
        else:
            fw = None                                  # gamma == 0: weight == 1

        if masked:
            # Only the trailing rows of the last spatial block can be garbage
            # (stale VMEM); keep select-based masking so NaN/Inf is discarded.
            row = jax.lax.broadcasted_iota(jnp.int32, (t_s, L), 0)
            valid = row < last_rows
            neg_log = jnp.where(valid, neg_log, 0.0)
            if need_fw:
                fw = jnp.where(valid, fw, 0.0)

        # Lane-dense accumulate: sublane-direction reduce + full-lane-width RMW.
        nll_ref[0] += jnp.sum(neg_log, axis=0, keepdims=True)
        if need_fw:
            fw_ref[0] += jnp.sum(fw, axis=0, keepdims=True)

    if last_rows == t_s:            # every spatial block is full: no mask at all
        compute(masked=False)
    else:
        @pl.when(j < n_sb - 1)
        def _full():
            compute(masked=False)

        @pl.when(j == n_sb - 1)
        def _tail():
            compute(masked=True)


def focal_loss_pallas(x_nchw, target_nhw, gamma=0.0, eps=1e-7,
                      target_block_bytes=4 * 1024 * 1024):
    N, C, H, W = x_nchw.shape
    HW = H * W
    M = N * HW

    # Zero-copy layout selection (no jnp.pad, no slice copy):
    #   * HW % 128 == 0: free contiguous view (N, C, HW/128, 128), lane-dense.
    #   * otherwise    : native (N, C, H, W); W fills the lane axis.
    if HW % LANES == 0:
        S, L = HW // LANES, LANES
    else:
        S, L = H, W
    x = x_nchw.reshape(N, C, S, L)                 # contiguous -> free
    t = target_nhw.reshape(N, S, L).astype(jnp.int32)

    # Block sizing: ~target_block_bytes of logits per grid step (in the input
    # dtype -- bf16 halves the dominant HBM stream), capped so double-buffered
    # blocks + f32 temporaries fit comfortably in scoped VMEM on all chips.
    isz = x.dtype.itemsize
    bytes_per_row = C * L * isz                    # one S-row of logits in HBM
    per_row_vmem = 2 * C * L * isz + 2 * L * 4 + 8 * L * 4
    vmem_budget = 40 * 1024 * 1024                 # safe under v7x 64 MiB physical
    t_s = max(8, int(target_block_bytes) // bytes_per_row)
    t_s = min(t_s, max(8, vmem_budget // per_row_vmem))
    t_s = (t_s // 8) * 8
    if t_s >= S:
        t_s = S                                    # full extent: no 8-alignment needed
    n_sb = pl.cdiv(S, t_s)
    last_rows = S - (n_sb - 1) * t_s               # valid rows in the last block
    vmem_limit = int(min(48 << 20, max(16 << 20, per_row_vmem * t_s + (2 << 20))))

    # TODO(synk): when N == 1 on v7x, additionally split the spatial-block axis
    # across the two TensorCores (leading parallel axis + per-core accumulator
    # slots) instead of relying on the batch axis alone.

    need_fw = (gamma != 0)
    kernel = functools.partial(
        _focal_kernel, C=C, gamma=gamma,
        lo=-math.log1p(-eps), hi=-math.log(eps),
        t_s=t_s, L=L, n_sb=n_sb, last_rows=last_rows, need_fw=need_fw)

    nll_acc, fw_acc = pl.pallas_call(
        kernel,
        out_shape=(jax.ShapeDtypeStruct((N, 1, L), jnp.float32),
                   jax.ShapeDtypeStruct((N, 1, L), jnp.float32)),
        grid_spec=pltpu.PrefetchScalarGridSpec(
            num_scalar_prefetch=0,
            grid=(N, n_sb),
            in_specs=[
                pl.BlockSpec((1, C, t_s, L), lambda n, j: (n, 0, j, 0)),
                pl.BlockSpec((1, t_s, L), lambda n, j: (n, j, 0)),
            ],
            out_specs=(
                pl.BlockSpec((1, 1, L), lambda n, j: (n, 0, 0)),
                pl.BlockSpec((1, 1, L), lambda n, j: (n, 0, 0)),
            ),
        ),
        compiler_params=pltpu.CompilerParams(
            dimension_semantics=("parallel", "arbitrary"),
            vmem_limit_bytes=vmem_limit),
    )(x, t)

    ce = jnp.sum(nll_acc) / M                      # F.nll_loss(..., 'mean')
    if not need_fw:
        return ce                                  # (1 - p_t) ** 0 == 1 exactly
    wmean = jnp.sum(fw_acc) / M                    # mean of (1 - p_t) ** gamma
    return ce * wmean


def focal_loss_ref(x_nchw, target_nhw, gamma=0.0, eps=1e-7):
    p = jax.nn.softmax(x_nchw.astype(jnp.float32), axis=1)
    p = jnp.clip(p, eps, 1.0 - eps)
    onehot = jax.nn.one_hot(target_nhw, x_nchw.shape[1], axis=1, dtype=jnp.float32)
    p_t = jnp.sum(p * onehot, axis=1)
    ce = jnp.mean(-jnp.log(p_t))
    return ce * jnp.mean((1.0 - p_t) ** gamma)


def _check(key, shape, gamma, eps=1e-7, **kw):
    N, C, H, W = shape
    kx, kt = jax.random.split(key)
    x = jax.random.normal(kx, (N, C, H, W), dtype=jnp.float32)
    tgt = jax.random.randint(kt, (N, H, W), 0, C, dtype=jnp.int32)
    out = jax.block_until_ready(focal_loss_pallas(x, tgt, gamma=gamma, eps=eps, **kw))
    ref = focal_loss_ref(x, tgt, gamma=gamma, eps=eps)
    np.testing.assert_allclose(np.asarray(out), np.asarray(ref),
                               rtol=1e-5, atol=1e-6)


if __name__ == "__main__":
    key = jax.random.PRNGKey(0)
    k1, k2, k3 = jax.random.split(key, 3)

    # Main case (module defaults are gamma=0, eps=1e-7; gamma=2 is typical use).
    _check(k1, (2, 4, 16, 16), gamma=2.0)
    # H*W not a multiple of 128 -> zero-copy native-layout path, gamma == 0.
    _check(k2, (2, 4, 10, 10), gamma=0.0)
    # Ragged spatial blocks (masked last block) + N == 1.
    _check(k3, (1, 4, 48, 48), gamma=2.0, target_block_bytes=8 * 4 * 128 * 4)

    print("KERNEL_OK")
</pallas_src>

<mosaic_0001>
module attributes {stable_mosaic.version = 11 : i64} {
  func.func @_focal_kernel(%arg0: i32, %arg1: i32, %arg2: memref<1x4x2x128xf32, #tpu.memory_space<vmem>>, %arg3: memref<1x2x128xi32, #tpu.memory_space<vmem>>, %arg4: memref<1x1x128xf32, #tpu.memory_space<vmem>>, %arg5: memref<1x1x128xf32, #tpu.memory_space<vmem>>) attributes {dimension_semantics = [#tpu.dimension_semantics<parallel>, #tpu.dimension_semantics<arbitrary>], iteration_bounds = array<i64: 2, 1>, scalar_prefetch = 0 : i64, scratch_operands = 0 : i64, tpu.core_type = #tpu.core_type<tc>, window_params = [{transform_indices = @transform_0, window_bounds = array<i64: 1, 4, 2, 128>}, {transform_indices = @transform_1, window_bounds = array<i64: 1, 2, 128>}, {transform_indices = @transform_2, window_bounds = array<i64: 1, 1, 128>}, {transform_indices = @transform_3, window_bounds = array<i64: 1, 1, 128>}]} {
    %c0_i32 = arith.constant 0 : i32
    %0 = arith.cmpi eq, %arg1, %c0_i32 : i32
    %1 = arith.extui %0 : i1 to i32
    %c0_i32_0 = arith.constant 0 : i32
    %2 = arith.cmpi ne, %1, %c0_i32_0 : i32
    scf.if %2 {
      %cst_56 = arith.constant 0.000000e+00 : f32
      %87 = vector.broadcast %cst_56 : f32 to vector<1x1x128xf32>
      %c0_57 = arith.constant 0 : index
      %c0_58 = arith.constant 0 : index
      %c0_59 = arith.constant 0 : index
      %88 = vector.load %arg4[%c0_57, %c0_58, %c0_59] : memref<1x1x128xf32, #tpu.memory_space<vmem>>, vector<1x1x128xf32>
      tpu.vector_store %arg4[%c0_57, %c0_58, %c0_59], %87 {strides = array<i32>} : memref<1x1x128xf32, #tpu.memory_space<vmem>>, vector<1x1x128xf32>,
      %cst_60 = arith.constant 0.000000e+00 : f32
      %89 = vector.broadcast %cst_60 : f32 to vector<1x1x128xf32>
      %c0_61 = arith.constant 0 : index
      %c0_62 = arith.constant 0 : index
      %c0_63 = arith.constant 0 : index
      %90 = vector.load %arg5[%c0_61, %c0_62, %c0_63] : memref<1x1x128xf32, #tpu.memory_space<vmem>>, vector<1x1x128xf32>
      tpu.vector_store %arg5[%c0_61, %c0_62, %c0_63], %89 {strides = array<i32>} : memref<1x1x128xf32, #tpu.memory_space<vmem>>, vector<1x1x128xf32>,
    } else {
    }
    %c0 = arith.constant 0 : index
    %c0_1 = arith.constant 0 : index
    %c0_2 = arith.constant 0 : index
    %3 = vector.load %arg3[%c0, %c0_1, %c0_2] : memref<1x2x128xi32, #tpu.memory_space<vmem>>, vector<1x2x128xi32>
    %4 = vector.shape_cast %3 : vector<1x2x128xi32> to vector<2x128xi32>
    %c0_3 = arith.constant 0 : index
    %c0_4 = arith.constant 0 : index
    %c0_5 = arith.constant 0 : index
    %c0_6 = arith.constant 0 : index
    %5 = vector.load %arg2[%c0_3, %c0_4, %c0_5, %c0_6] : memref<1x4x2x128xf32, #tpu.memory_space<vmem>>, vector<1x1x2x128xf32>
    %6 = vector.shape_cast %5 : vector<1x1x2x128xf32> to vector<2x128xf32>
    %c0_7 = arith.constant 0 : index
    %c1 = arith.constant 1 : index
    %c0_8 = arith.constant 0 : index
    %c0_9 = arith.constant 0 : index
    %7 = vector.load %arg2[%c0_7, %c1, %c0_8, %c0_9] : memref<1x4x2x128xf32, #tpu.memory_space<vmem>>, vector<1x1x2x128xf32>
    %8 = vector.shape_cast %7 : vector<1x1x2x128xf32> to vector<2x128xf32>
    %9 = arith.maximumf %6, %8 : vector<2x128xf32>
    %c0_10 = arith.constant 0 : index
    %c2 = arith.constant 2 : index
    %c0_11 = arith.constant 0 : index
    %c0_12 = arith.constant 0 : index
    %10 = vector.load %arg2[%c0_10, %c2, %c0_11, %c0_12] : memref<1x4x2x128xf32, #tpu.memory_space<vmem>>, vector<1x1x2x128xf32>
    %11 = vector.shape_cast %10 : vector<1x1x2x128xf32> to vector<2x128xf32>
    %12 = arith.maximumf %9, %11 : vector<2x128xf32>
    %c0_13 = arith.constant 0 : index
    %c3 = arith.constant 3 : index
    %c0_14 = arith.constant 0 : index
    %c0_15 = arith.constant 0 : index
    %13 = vector.load %arg2[%c0_13, %c3, %c0_14, %c0_15] : memref<1x4x2x128xf32, #tpu.memory_space<vmem>>, vector<1x1x2x128xf32>
    %14 = vector.shape_cast %13 : vector<1x1x2x128xf32> to vector<2x128xf32>
    %15 = arith.maximumf %12, %14 : vector<2x128xf32>
    %cst = arith.constant 0.000000e+00 : f32
    %16 = vector.broadcast %cst : f32 to vector<2x128xf32>
    %cst_16 = arith.constant 0.000000e+00 : f32
    %17 = vector.broadcast %cst_16 : f32 to vector<2x128xf32>
    %c0_17 = arith.constant 0 : index
    %c0_18 = arith.constant 0 : index
    %c0_19 = arith.constant 0 : index
    %c0_20 = arith.constant 0 : index
    %18 = vector.load %arg2[%c0_17, %c0_18, %c0_19, %c0_20] : memref<1x4x2x128xf32, #tpu.memory_space<vmem>>, vector<1x1x2x128xf32>
    %19 = vector.shape_cast %18 : vector<1x1x2x128xf32> to vector<2x128xf32>
    %20 = arith.subf %19, %15 : vector<2x128xf32>
    %21 = math.exp %20 : vector<2x128xf32>
    %22 = arith.addf %16, %21 : vector<2x128xf32>
    %c0_i32_21 = arith.constant 0 : i32
    %23 = vector.broadcast %c0_i32_21 : i32 to vector<2x128xi32>
    %24 = arith.cmpi eq, %4, %23 : vector<2x128xi32>
    %cst_22 = arith.constant 0.000000e+00 : f32
    %25 = vector.broadcast %cst_22 : f32 to vector<2x128xf32>
    %26 = arith.select %24, %19, %25 : vector<2x128xi1>, vector<2x128xf32>
    %27 = arith.addf %17, %26 : vector<2x128xf32>
    %c0_23 = arith.constant 0 : index
    %c1_24 = arith.constant 1 : index
    %c0_25 = arith.constant 0 : index
    %c0_26 = arith.constant 0 : index
    %28 = vector.load %arg2[%c0_23, %c1_24, %c0_25, %c0_26] : memref<1x4x2x128xf32, #tpu.memory_space<vmem>>, vector<1x1x2x128xf32>
    %29 = vector.shape_cast %28 : vector<1x1x2x128xf32> to vector<2x128xf32>
    %30 = arith.subf %29, %15 : vector<2x128xf32>
    %31 = math.exp %30 : vector<2x128xf32>
    %32 = arith.addf %22, %31 : vector<2x128xf32>
    %c1_i32 = arith.constant 1 : i32
    %33 = vector.broadcast %c1_i32 : i32 to vector<2x128xi32>
    %34 = arith.cmpi eq, %4, %33 : vector<2x128xi32>
    %cst_27 = arith.constant 0.000000e+00 : f32
    %35 = vector.broadcast %cst_27 : f32 to vector<2x128xf32>
    %36 = arith.select %34, %29, %35 : vector<2x128xi1>, vector<2x128xf32>
    %37 = arith.addf %27, %36 : vector<2x128xf32>
    %c0_28 = arith.constant 0 : index
    %c2_29 = arith.constant 2 : index
    %c0_30 = arith.constant 0 : index
    %c0_31 = arith.constant 0 : index
    %38 = vector.load %arg2[%c0_28, %c2_29, %c0_30, %c0_31] : memref<1x4x2x128xf32, #tpu.memory_space<vmem>>, vector<1x1x2x128xf32>
    %39 = vector.shape_cast %38 : vector<1x1x2x128xf32> to vector<2x128xf32>
    %40 = arith.subf %39, %15 : vector<2x128xf32>
    %41 = math.exp %40 : vector<2x128xf32>
    %42 = arith.addf %32, %41 : vector<2x128xf32>
    %c2_i32 = arith.constant 2 : i32
    %43 = vector.broadcast %c2_i32 : i32 to vector<2x128xi32>
    %44 = arith.cmpi eq, %4, %43 : vector<2x128xi32>
    %cst_32 = arith.constant 0.000000e+00 : f32
    %45 = vector.broadcast %cst_32 : f32 to vector<2x128xf32>
    %46 = arith.select %44, %39, %45 : vector<2x128xi1>, vector<2x128xf32>
    %47 = arith.addf %37, %46 : vector<2x128xf32>
    %c0_33 = arith.constant 0 : index
    %c3_34 = arith.constant 3 : index
    %c0_35 = arith.constant 0 : index
    %c0_36 = arith.constant 0 : index
    %48 = vector.load %arg2[%c0_33, %c3_34, %c0_35, %c0_36] : memref<1x4x2x128xf32, #tpu.memory_space<vmem>>, vector<1x1x2x128xf32>
    %49 = vector.shape_cast %48 : vector<1x1x2x128xf32> to vector<2x128xf32>
    %50 = arith.subf %49, %15 : vector<2x128xf32>
    %51 = math.exp %50 : vector<2x128xf32>
    %52 = arith.addf %42, %51 : vector<2x128xf32>
    %c3_i32 = arith.constant 3 : i32
    %53 = vector.broadcast %c3_i32 : i32 to vector<2x128xi32>
    %54 = arith.cmpi eq, %4, %53 : vector<2x128xi32>
    %cst_37 = arith.constant 0.000000e+00 : f32
    %55 = vector.broadcast %cst_37 : f32 to vector<2x128xf32>
    %56 = arith.select %54, %49, %55 : vector<2x128xi1>, vector<2x128xf32>
    %57 = arith.addf %47, %56 : vector<2x128xf32>
    %58 = math.log %52 : vector<2x128xf32>
    %59 = arith.addf %15, %58 : vector<2x128xf32>
    %60 = arith.subf %59, %57 : vector<2x128xf32>
    %cst_38 = arith.constant 1.00000008E-7 : f32
    %cst_39 = arith.constant 16.1180954 : f32
    %61 = vector.broadcast %cst_38 : f32 to vector<2x128xf32>
    %62 = arith.maximumf %61, %60 : vector<2x128xf32>
    %63 = vector.broadcast %cst_39 : f32 to vector<2x128xf32>
    %64 = arith.minimumf %63, %62 : vector<2x128xf32>
    %cst_40 = arith.constant 0.000000e+00 : f32
    %65 = vector.broadcast %cst_40 : f32 to vector<2x128xf32>
    %66 = arith.subf %65, %64 : vector<2x128xf32>
    %67 = math.exp %66 : vector<2x128xf32>
    %cst_41 = arith.constant 1.000000e+00 : f32
    %68 = vector.broadcast %cst_41 : f32 to vector<2x128xf32>
    %69 = arith.subf %68, %67 : vector<2x128xf32>
    %70 = arith.mulf %69, %69 : vector<2x128xf32>
    %c0_42 = arith.constant 0 : index
    %c0_43 = arith.constant 0 : index
    %c0_44 = arith.constant 0 : index
    %71 = vector.load %arg4[%c0_42, %c0_43, %c0_44] : memref<1x1x128xf32, #tpu.memory_space<vmem>>, vector<1x1x128xf32>
    %72 = vector.shape_cast %71 : vector<1x1x128xf32> to vector<1x128xf32>
    %cst_45 = arith.constant dense<0.000000e+00> : vector<128xf32>
    %73 = vector.multi_reduction <add>, %64, %cst_45 [0] : vector<2x128xf32> to vector<128xf32>
    %74 = vector.shape_cast %73 : vector<128xf32> to vector<1x128xf32>
    %75 = arith.addf %72, %74 : vector<1x128xf32>
    %c0_46 = arith.constant 0 : index
    %c0_47 = arith.constant 0 : index
    %c0_48 = arith.constant 0 : index
    %76 = vector.load %arg4[%c0_46, %c0_47, %c0_48] : memref<1x1x128xf32, #tpu.memory_space<vmem>>, vector<1x1x128xf32>
    %77 = vector.shape_cast %76 : vector<1x1x128xf32> to vector<1x128xf32>
    %78 = vector.shape_cast %75 : vector<1x128xf32> to vector<1x1x128xf32>
    tpu.vector_store %arg4[%c0_46, %c0_47, %c0_48], %78 {strides = array<i32>} : memref<1x1x128xf32, #tpu.memory_space<vmem>>, vector<1x1x128xf32>,
    %c0_49 = arith.constant 0 : index
    %c0_50 = arith.constant 0 : index
    %c0_51 = arith.constant 0 : index
    %79 = vector.load %arg5[%c0_49, %c0_50, %c0_51] : memref<1x1x128xf32, #tpu.memory_space<vmem>>, vector<1x1x128xf32>
    %80 = vector.shape_cast %79 : vector<1x1x128xf32> to vector<1x128xf32>
    %cst_52 = arith.constant dense<0.000000e+00> : vector<128xf32>
    %81 = vector.multi_reduction <add>, %70, %cst_52 [0] : vector<2x128xf32> to vector<128xf32>
    %82 = vector.shape_cast %81 : vector<128xf32> to vector<1x128xf32>
    %83 = arith.addf %80, %82 : vector<1x128xf32>
    %c0_53 = arith.constant 0 : index
    %c0_54 = arith.constant 0 : index
    %c0_55 = arith.constant 0 : index
    %84 = vector.load %arg5[%c0_53, %c0_54, %c0_55] : memref<1x1x128xf32, #tpu.memory_space<vmem>>, vector<1x1x128xf32>
    %85 = vector.shape_cast %84 : vector<1x1x128xf32> to vector<1x128xf32>
    %86 = vector.shape_cast %83 : vector<1x128xf32> to vector<1x1x128xf32>
    tpu.vector_store %arg5[%c0_53, %c0_54, %c0_55], %86 {strides = array<i32>} : memref<1x1x128xf32, #tpu.memory_space<vmem>>, vector<1x1x128xf32>,
    return
  }
  func.func @transform_0(%arg0: i32, %arg1: i32) -> (i32, i32, i32, i32) {
    %c0_i32 = arith.constant 0 : i32
    %c0_i32_0 = arith.constant 0 : i32
    %c0_i32_1 = arith.constant 0 : i32
    return %arg0, %c0_i32, %arg1, %c0_i32_0 : i32, i32, i32, i32
  }
  func.func @transform_1(%arg0: i32, %arg1: i32) -> (i32, i32, i32) {
    %c0_i32 = arith.constant 0 : i32
    %c0_i32_0 = arith.constant 0 : i32
    return %arg0, %arg1, %c0_i32 : i32, i32, i32
  }
  func.func @transform_2(%arg0: i32, %arg1: i32) -> (i32, i32, i32) {
    %c0_i32 = arith.constant 0 : i32
    %c0_i32_0 = arith.constant 0 : i32
    %c0_i32_1 = arith.constant 0 : i32
    return %arg0, %c0_i32, %c0_i32_0 : i32, i32, i32
  }
  func.func @transform_3(%arg0: i32, %arg1: i32) -> (i32, i32, i32) {
    %c0_i32 = arith.constant 0 : i32
    %c0_i32_0 = arith.constant 0 : i32
    %c0_i32_1 = arith.constant 0 : i32
    return %arg0, %c0_i32, %c0_i32_0 : i32, i32, i32
  }
}

</mosaic_0001>

<llo_original>
// kernel: tpu_custom_call.1
$region0: #{tpu_custom_call.1}
  #allocation0 [shape = 'u32[]', space=smem, size = 0x4, offset = 0x4, fixed_abs, tag = 'smem constant byte address 0x4 - core index']
  #allocation1 [shape = 'u32[144,128]{1,0:T(1,128)}', space=vmem, size = 0x12000, scoped, tag = 'internal scratch']
  %s0 = inlined_call_operand.hbm [shape: f32[2,4,2,128], index: 0, kind: input, shape index: {}]
  %s1 = inlined_call_operand.hbm [shape: s32[2,2,128], index: 1, kind: input, shape index: {}]
  %s2 = inlined_call_operand.hbm [shape: f32[2,1,128], index: 2, kind: output, shape index: {0}]
  %s3 = inlined_call_operand.hbm [shape: f32[2,1,128], index: 3, kind: output, shape index: {1}]
  %4 = xla_tuple %s2, %s3
  %s5 = sld [smem:[#allocation0]]
  $region61: #{tpu_custom_call.1} parent=0
    _
  %s7 = ssub.s32 1, %s5
  %s8 = scalar_select 0, %s7, %s5
  $region1: #{tpu_custom_call.1} parent=0
    #allocation2 [shape = 'u8[8192]{0}', space=vmem, size = 0x2000, scoped, tag = 'input window, operand 0']
    #allocation3 [shape = 's32[2]{0}', space=sflag, size = 0x8, scoped, tag = 'scoped memory for tpu_custom_call.1']
    #allocation4 [shape = 's32[2]{0}', space=sflag, size = 0x8, scoped, tag = 'scoped memory for tpu_custom_call.1']
    #allocation5 [shape = 'u8[2048]{0}', space=vmem, size = 0x800, scoped, tag = 'input window, operand 1']
    #allocation6 [shape = 's32[2]{0}', space=sflag, size = 0x8, scoped, tag = 'scoped memory for tpu_custom_call.1']
    #allocation7 [shape = 'u8[1024]{0}', space=vmem, size = 0x400, scoped, tag = 'output window, operand 0']
    #allocation8 [shape = 'u8[1024]{0}', space=vmem, size = 0x400, scoped, tag = 'output window, operand 1']
    #allocation9 [shape = 's32[2]{0}', space=sflag, size = 0x8, scoped, tag = 'scoped memory for tpu_custom_call.1']
    %9 = vsyncpa [#allocation3], 0
    %s10 = scalar_lea.sflag [#allocation3], 1
    %11 = vsyncpa %s10, 0
    %12 = vsyncpa [#allocation6], 0
    %s13 = scalar_lea.sflag [#allocation6], 1
    %14 = vsyncpa %s13, 0
    %15 = vsyncpa [#allocation4], 0
    %s16 = scalar_lea.sflag [#allocation4], 1
    %17 = vsyncpa %s16, 0
    %18 = vsyncpa [#allocation9], 0
    %s19 = scalar_lea.sflag [#allocation9], 1
    %20 = vsyncpa %s19, 0
    loop: start=0, step=1, limit=4
    $region2: #{tpu_custom_call.1} parent=1 // loop_pre_header
      _
    $region3: #{tpu_custom_call.1} parent=1 // loop_header
      %s22 = sphi 0, %s26
      %p23 = scmp.ge.s32.totalorder %s22, 4
      %s29 = sphi 0, %s41
      %s30 = sphi 0, %s37
      %s31 = sphi 0, %s29
      %s32 = sphi 0, %s30
      %s33 = sphi 0, %s31
      %s34 = sphi 0, %s32
      %s46 = sphi 0, %s48
      %s49 = sphi 0, %s46
      %s50 = sphi 0, %s49
      %s66 = sphi 0, %s50
      %s74 = sphi 0, %s76
      %s77 = sphi 0, %s74
      %s78 = sphi 0, %s77
      %s94 = sphi 0, %s78
      %s100 = sphi 0, %s102
      %s103 = sphi 0, %s100
      %s104 = sphi 0, %s103
      %s120 = sphi 0, %s104
      %s126 = sphi 0, %s128
      %s129 = sphi 0, %s126
      %s130 = sphi 0, %s129
      %s146 = sphi 0, %s130
    $region4: #{tpu_custom_call.1} parent=1 // loop_header_branch
      %25 = sbr.rel (%p23) target = $region8
    $region5: #{tpu_custom_call.1} parent=1 // loop_body
      %s27 = ssub.s32 %s22, 1
      %s28 = ssub.s32 %s22, 2
      %s35 = sadd.s32 1, %s30
      %p36 = scmp.ge.s32.totalorder %s35, 1
      %s37 = scalar_select %p36, 0, %s35
      %s38 = sadd.s32 1, %s29
      %s39 = scalar_select %p36, %s38, %s29
      %p40 = scmp.ge.s32.totalorder %s39, 2
      %s41 = scalar_select %p40, 0, %s39
      %s42 = ssub.s32 %s29, %s41
      %s43 = ssub.s32 %s30, %s37
      %s44 = sor.u32 %s42, %s43
      %p45 = scmp.eq.s32.totalorder %s44, 0
      %s47 = sadd.s32 %s46, 1
      %s48 = scalar_select %p45, %s46, %s47
      %p51 = pneg %p45
      %p52 = scmp.eq.s32.totalorder %s22, 1
      %p53 = por %p51, %p52
      %p54 = scmp.ne.s32.totalorder %s46, %s49
      %p55 = scmp.eq.s32.totalorder %s22, 0
      %p56 = por %p54, %p55
      %p57 = scmp.ne.s32.totalorder %s46, %s49
      %p58 = scmp.eq.s32.totalorder %s27, 1
      %p59 = por %p57, %p58
      %p60 = scmp.ne.s32.totalorder %s49, %s50
      %p61 = scmp.eq.s32.totalorder %s27, 0
      %p62 = por %p60, %p61
      %p63 = scmp.ne.s32.totalorder %s49, %s50
      %p64 = scmp.eq.s32.totalorder %s28, 1
      %p65 = por %p63, %p64
      %p67 = scmp.ne.s32.totalorder %s50, %s66
      %p68 = scmp.eq.s32.totalorder %s28, 0
      %p69 = por %p67, %p68
      %s70 = ssub.s32 %s29, %s41
      %s71 = ssub.s32 %s30, %s37
      %s72 = sor.u32 %s70, %s71
      %p73 = scmp.eq.s32.totalorder %s72, 0
      %s75 = sadd.s32 %s74, 1
      %s76 = scalar_select %p73, %s74, %s75
      %p79 = pneg %p73
      %p80 = scmp.eq.s32.totalorder %s22, 1
      %p81 = por %p79, %p80
      %p82 = scmp.ne.s32.totalorder %s74, %s77
      %p83 = scmp.eq.s32.totalorder %s22, 0
      %p84 = por %p82, %p83
      %p85 = scmp.ne.s32.totalorder %s74, %s77
      %p86 = scmp.eq.s32.totalorder %s27, 1
      %p87 = por %p85, %p86
      %p88 = scmp.ne.s32.totalorder %s77, %s78
      %p89 = scmp.eq.s32.totalorder %s27, 0
      %p90 = por %p88, %p89
      %p91 = scmp.ne.s32.totalorder %s77, %s78
      %p92 = scmp.eq.s32.totalorder %s28, 1
      %p93 = por %p91, %p92
      %p95 = scmp.ne.s32.totalorder %s78, %s94
      %p96 = scmp.eq.s32.totalorder %s28, 0
      %p97 = por %p95, %p96
      %s98 = ssub.s32 %s29, %s41
      %p99 = scmp.eq.s32.totalorder %s98, 0
      %s101 = sadd.s32 %s100, 1
      %s102 = scalar_select %p99, %s100, %s101
      %p105 = pneg %p99
      %p106 = scmp.eq.s32.totalorder %s22, 1
      %p107 = por %p105, %p106
      %p108 = scmp.ne.s32.totalorder %s100, %s103
      %p109 = scmp.eq.s32.totalorder %s22, 0
      %p110 = por %p108, %p109
      %p111 = scmp.ne.s32.totalorder %s100, %s103
      %p112 = scmp.eq.s32.totalorder %s27, 1
      %p113 = por %p111, %p112
      %p114 = scmp.ne.s32.totalorder %s103, %s104
      %p115 = scmp.eq.s32.totalorder %s27, 0
      %p116 = por %p114, %p115
      %p117 = scmp.ne.s32.totalorder %s103, %s104
      %p118 = scmp.eq.s32.totalorder %s28, 1
      %p119 = por %p117, %p118
      %p121 = scmp.ne.s32.totalorder %s104, %s120
      %p122 = scmp.eq.s32.totalorder %s28, 0
      %p123 = por %p121, %p122
      %s124 = ssub.s32 %s29, %s41
      %p125 = scmp.eq.s32.totalorder %s124, 0
      %s127 = sadd.s32 %s126, 1
      %s128 = scalar_select %p125, %s126, %s127
      %p131 = pneg %p125
      %p132 = scmp.eq.s32.totalorder %s22, 1
      %p133 = por %p131, %p132
      %p134 = scmp.ne.s32.totalorder %s126, %s129
      %p135 = scmp.eq.s32.totalorder %s22, 0
      %p136 = por %p134, %p135
      %p137 = scmp.ne.s32.totalorder %s126, %s129
      %p138 = scmp.eq.s32.totalorder %s27, 1
      %p139 = por %p137, %p138
      %p140 = scmp.ne.s32.totalorder %s129, %s130
      %p141 = scmp.eq.s32.totalorder %s27, 0
      %p142 = por %p140, %p141
      %p143 = scmp.ne.s32.totalorder %s129, %s130
      %p144 = scmp.eq.s32.totalorder %s28, 1
      %p145 = por %p143, %p144
      %p147 = scmp.ne.s32.totalorder %s130, %s146
      %p148 = scmp.eq.s32.totalorder %s28, 0
      %p149 = por %p147, %p148
      %p150 = scmp.le.s32.totalorder 1, %s22
      %p151 = scmp.lt.s32.totalorder %s22, 3
      %p152 = pnand %p150, %p151
      %p153 = pneg %p152
      // Predicated region
      $region9: #{tpu_custom_call.1} parent=5 // pred_check
        _
      $region10: #{tpu_custom_call.1} parent=5 // pred_check_branch
        %155 = sbr.rel (%p152) target = $region12
      $region11: #{tpu_custom_call.1} parent=5 // pred_region
        %s156 = ssub.s32 %s22, 1
      $region12: #{tpu_custom_call.1} parent=5 // pred_fallthru
        _
      %p157 = scmp.lt.s32.totalorder %s22, 2
      // Predicated region
      $region13: #{tpu_custom_call.1} parent=5 // pred_check
        %p158 = pneg %p157
      $region14: #{tpu_custom_call.1} parent=5 // pred_check_branch
        %160 = sbr.rel (%p158) target = $region16
      $region15: #{tpu_custom_call.1} parent=5 // pred_region
        // Predicated region
        $region17: #{tpu_custom_call.1} parent=15 // pred_check
          %p161 = pneg %p56
        $region18: #{tpu_custom_call.1} parent=15 // pred_check_branch
          %163 = sbr.rel (%p161) target = $region20
        $region19: #{tpu_custom_call.1} parent=15 // pred_region
          %s164 = sand.u32 %s46, 1
          %s165 = scalar_lea.sflag [#allocation3], %s164
          %s166 = sand.u32 %s46, 1
          %s167 = smul.addr %s166, 8
          %s168 = scalar_lea.vmem [#allocation2], %s167
          %s170 = ssub.s32 128, 128
          %171 = vsyncadd %s165, %s170
          %s172 = smul.addr %s29, 4
          %s173 = sadd.s32 %s30, %s172
          %s174 = smul.addr %s173, 32
          %s175 = scalar_lea.hbm %s0, %s174
          %s176 = sshll.u32 %s168, 4
          %s177 = int_to_ptr.vmem [resolvable:$true] %s176
          %182 = dma.hbm_to_vmem [thread:$0]  %s175, 128, %s177, %s165, 32, 32, 2
        $region20: #{tpu_custom_call.1} parent=15 // pred_fallthru
          _
        // Predicated region
        $region21: #{tpu_custom_call.1} parent=15 // pred_check
          %p183 = pneg %p84
        $region22: #{tpu_custom_call.1} parent=15 // pred_check_branch
          %185 = sbr.rel (%p183) target = $region24
        $region23: #{tpu_custom_call.1} parent=15 // pred_region
          %s186 = sand.u32 %s74, 1
          %s187 = scalar_lea.sflag [#allocation6], %s186
          %s188 = sand.u32 %s74, 1
          %s189 = smul.addr %s188, 2
          %s190 = scalar_lea.vmem [#allocation5], %s189
          %s192 = ssub.s32 32, 32
          %193 = vsyncadd %s187, %s192
          %s194 = sadd.s32 %s30, %s29
          %s195 = smul.addr %s194, 32
          %s196 = scalar_lea.hbm %s1, %s195
          %s198 = sshll.u32 %s190, 4
          %s199 = int_to_ptr.vmem [resolvable:$true] %s198
          %201 = dma.hbm_to_vmem [thread:$0]  %s196, 32, %s199, %s187
        $region24: #{tpu_custom_call.1} parent=15 // pred_fallthru
          _
      $region16: #{tpu_custom_call.1} parent=5 // pred_fallthru
        _
      %p202 = scmp.le.s32.totalorder 1, %s22
      %p203 = scmp.lt.s32.totalorder %s22, 3
      %p204 = pnand %p202, %p203
      %p205 = pneg %p204
      // Predicated region
      $region25: #{tpu_custom_call.1} parent=5 // pred_check
        _
      $region26: #{tpu_custom_call.1} parent=5 // pred_check_branch
        %207 = sbr.rel (%p204) target = $region28
      $region27: #{tpu_custom_call.1} parent=5 // pred_region
        %s208 = ssub.s32 %s22, 1
        %s209 = sand.u32 %s49, 1
        %s210 = scalar_lea.sflag [#allocation3], %s209
        %s211 = sand.u32 %s49, 1
        %s212 = smul.addr %s211, 8
        %s213 = scalar_lea.vmem [#allocation2], %s212
        // Predicated region
        $region29: #{tpu_custom_call.1} parent=27 // pred_check
          %p214 = pneg %p62
        $region30: #{tpu_custom_call.1} parent=27 // pred_check_branch
          %216 = sbr.rel (%p214) target = $region32
        $region31: #{tpu_custom_call.1} parent=27 // pred_region
          %217 = dma.done %s210, 128
        $region32: #{tpu_custom_call.1} parent=27 // pred_fallthru
          _
        %s218 = sand.u32 %s77, 1
        %s219 = scalar_lea.sflag [#allocation6], %s218
        %s220 = sand.u32 %s77, 1
        %s221 = smul.addr %s220, 2
        %s222 = scalar_lea.vmem [#allocation5], %s221
        // Predicated region
        $region33: #{tpu_custom_call.1} parent=27 // pred_check
          %p223 = pneg %p90
        $region34: #{tpu_custom_call.1} parent=27 // pred_check_branch
          %225 = sbr.rel (%p223) target = $region36
        $region35: #{tpu_custom_call.1} parent=27 // pred_region
          %226 = dma.done %s219, 32
        $region36: #{tpu_custom_call.1} parent=27 // pred_fallthru
          _
        %s227 = sand.u32 %s49, 1
        %s228 = scalar_lea.sflag [#allocation3], %s227
        %s229 = sand.u32 %s49, 1
        %s230 = smul.addr %s229, 8
        %s231 = scalar_lea.vmem [#allocation2], %s230
        %p232 = pneg %p62
        %p233 = pneg %p59
        %s234 = sand.u32 %s77, 1
        %s235 = scalar_lea.sflag [#allocation6], %s234
        %s236 = sand.u32 %s77, 1
        %s237 = smul.addr %s236, 2
        %s238 = scalar_lea.vmem [#allocation5], %s237
        %p239 = pneg %p90
        %p240 = pneg %p87
        %p241 = pneg %p116
        %p242 = pneg %p113
        %s243 = sand.u32 %s103, 1
        %s244 = scalar_lea.sflag [#allocation4], %s243
        %s245 = sand.u32 %s103, 1
        %s246 = scalar_lea.vmem [#allocation7], %s245
        %p247 = pneg %p142
        %p248 = pneg %p139
        %s249 = sand.u32 %s129, 1
        %s250 = scalar_lea.sflag [#allocation9], %s249
        %s251 = sand.u32 %s129, 1
        %s252 = scalar_lea.vmem [#allocation8], %s251
        %p253 = scmp.eq.s32.totalorder %s32, 0
        // Predicated region
        $region37: #{tpu_custom_call.1} parent=27 // pred_check
          %p254 = pneg %p253
        $region38: #{tpu_custom_call.1} parent=27 // pred_check_branch
          %256 = sbr.rel (%p254) target = $region40
        $region39: #{tpu_custom_call.1} parent=27 // pred_region
          %257 = vst [vmem:[%s246] sm:$0x1] 0.0
          %258 = vst [vmem:[%s252] sm:$0x1] 0.0
        $region40: #{tpu_custom_call.1} parent=27 // pred_fallthru
          _
        %v259 = vld [vmem:[%s222] sm:$0x3]
        %v260 = vld [vmem:[%s213] sm:$0x3]
        %s261 = scalar_lea.vmem %s213, 2 [#allocation2]
        %v262 = vld [vmem:[%s261] sm:$0x3]
        %v263 = vmax.f32 %v260, %v262
        %s264 = scalar_lea.vmem %s213, 4 [#allocation2]
        %v265 = vld [vmem:[%s264] sm:$0x3]
        %v266 = vmax.f32 %v263, %v265
        %s267 = scalar_lea.vmem %s213, 6 [#allocation2]
        %v268 = vld [vmem:[%s267] sm:$0x3]
        %v269 = vmax.f32 %v266, %v268
        %v270 = vsub.f32 %v260, %v269
        %v271 = vmul.f32 %v270, 1.442695
        %v272 = vpow.pop %v271
        %v273 = vadd.f32 %v272, 0.0
        %vm274 = vcmp.eq.s32.totalorder %v259, 0
        %v275 = vsel %vm274, %v260, 0.0
        %v276 = vadd.f32 %v275, 0.0
        %v277 = vsub.f32 %v262, %v269
        %v278 = vmul.f32 %v277, 1.442695
        %v279 = vpow.pop %v278
        %v280 = vadd.f32 %v273, %v279
        %vm281 = vcmp.eq.s32.totalorder %v259, 1
        %v282 = vsel %vm281, %v262, 0.0
        %v283 = vadd.f32 %v276, %v282
        %v284 = vsub.f32 %v265, %v269
        %v285 = vmul.f32 %v284, 1.442695
        %v286 = vpow.pop %v285
        %v287 = vadd.f32 %v280, %v286
        %vm288 = vcmp.eq.s32.totalorder %v259, 2
        %v289 = vsel %vm288, %v265, 0.0
        %v290 = vadd.f32 %v283, %v289
        %v291 = vsub.f32 %v268, %v269
        %v292 = vmul.f32 %v291, 1.442695
        %v293 = vpow.pop %v292
        %v294 = vadd.f32 %v287, %v293
        %vm295 = vcmp.eq.s32.totalorder %v259, 3
        %v296 = vsel %vm295, %v268, 0.0
        %v297 = vadd.f32 %v290, %v296
        %v298 = vlog2.pop %v294
        %v299 = vmul.f32 %v298, 0.6931472
        %v300 = vadd.f32 %v269, %v299
        %v301 = vsub.f32 %v300, %v297
        %v302 = vmax.f32 %v301, 1.0000001e-07
        %v303 = vmin.f32 %v302, 16.118095
        %v304 = vsub.f32 0.0, %v303
        %v305 = vmul.f32 %v304, 1.442695
        %v306 = vpow.pop %v305
        %v307 = vsub.f32 1.0, %v306
        %v308 = vmul.f32 %v307, %v307
        %v309 = vld [vmem:[%s246] sm:$0x1]
        %vm310 = vcmask 1041408
        %v311 = vsel %vm310, %v303, 0.0
        %v312 = vrot.slane %v311, 4
        %v313 = vadd.f32 %v311, %v312
        %v314 = vrot.slane %v313, 2
        %v315 = vadd.f32 %v313, %v314
        %v316 = vrot.slane %v315, 1
        %v317 = vadd.f32 %v315, %v316
        %v318 = vadd.f32 %v309, %v317
        %319 = vst [vmem:[%s246] sm:$0x1] %v318
        %v320 = vld [vmem:[%s252] sm:$0x1]
        %v321 = vsel %vm310, %v308, 0.0
        %v322 = vrot.slane %v321, 4
        %v323 = vadd.f32 %v321, %v322
        %v324 = vrot.slane %v323, 2
        %v325 = vadd.f32 %v323, %v324
        %v326 = vrot.slane %v325, 1
        %v327 = vadd.f32 %v325, %v326
        %v328 = vadd.f32 %v320, %v327
        %329 = vst [vmem:[%s252] sm:$0x1] %v328
        %s330 = sand.u32 %s103, 1
        %s331 = scalar_lea.sflag [#allocation4], %s330
        %s332 = sand.u32 %s103, 1
        %s333 = scalar_lea.vmem [#allocation7], %s332
        %s334 = sand.u32 %s129, 1
        %s335 = scalar_lea.sflag [#allocation9], %s334
        %s336 = sand.u32 %s129, 1
        %s337 = scalar_lea.vmem [#allocation8], %s336
        // Predicated region
        $region41: #{tpu_custom_call.1} parent=27 // pred_check
          %p338 = pneg %p113
        $region42: #{tpu_custom_call.1} parent=27 // pred_check_branch
          %340 = sbr.rel (%p338) target = $region44
        $region43: #{tpu_custom_call.1} parent=27 // pred_region
          %s342 = ssub.s32 16, 16
          %343 = vsyncadd %s331, %s342
          %s344 = smul.addr %s31, 16
          %s345 = scalar_lea.hbm %s2, %s344
          %s347 = sshll.u32 %s333, 4
          %s348 = int_to_ptr.vmem [resolvable:$true] %s347
          %350 = dma.vmem_to_hbm [thread:$0]  %s348, 16, %s345, %s331
        $region44: #{tpu_custom_call.1} parent=27 // pred_fallthru
          _
        // Predicated region
        $region45: #{tpu_custom_call.1} parent=27 // pred_check
          %p351 = pneg %p139
        $region46: #{tpu_custom_call.1} parent=27 // pred_check_branch
          %353 = sbr.rel (%p351) target = $region48
        $region47: #{tpu_custom_call.1} parent=27 // pred_region
          %s355 = ssub.s32 16, 16
          %356 = vsyncadd %s335, %s355
          %s357 = smul.addr %s31, 16
          %s358 = scalar_lea.hbm %s3, %s357
          %s360 = sshll.u32 %s337, 4
          %s361 = int_to_ptr.vmem [resolvable:$true] %s360
          %363 = dma.vmem_to_hbm [thread:$0]  %s361, 16, %s358, %s335
        $region48: #{tpu_custom_call.1} parent=27 // pred_fallthru
          _
      $region28: #{tpu_custom_call.1} parent=5 // pred_fallthru
        _
      %p364 = scmp.le.s32.totalorder 2, %s22
      // Predicated region
      $region49: #{tpu_custom_call.1} parent=5 // pred_check
        %p365 = pneg %p364
      $region50: #{tpu_custom_call.1} parent=5 // pred_check_branch
        %367 = sbr.rel (%p365) target = $region52
      $region51: #{tpu_custom_call.1} parent=5 // pred_region
        %s368 = ssub.s32 %s22, 2
        // Predicated region
        $region53: #{tpu_custom_call.1} parent=51 // pred_check
          %p369 = pneg %p119
        $region54: #{tpu_custom_call.1} parent=51 // pred_check_branch
          %371 = sbr.rel (%p369) target = $region56
        $region55: #{tpu_custom_call.1} parent=51 // pred_region
          %s372 = sand.u32 %s104, 1
          %s373 = scalar_lea.sflag [#allocation4], %s372
          %s374 = sand.u32 %s104, 1
          %s375 = scalar_lea.vmem [#allocation7], %s374
          %376 = dma.done %s373, 16
        $region56: #{tpu_custom_call.1} parent=51 // pred_fallthru
          _
        // Predicated region
        $region57: #{tpu_custom_call.1} parent=51 // pred_check
          %p377 = pneg %p145
        $region58: #{tpu_custom_call.1} parent=51 // pred_check_branch
          %379 = sbr.rel (%p377) target = $region60
        $region59: #{tpu_custom_call.1} parent=51 // pred_region
          %s380 = sand.u32 %s130, 1
          %s381 = scalar_lea.sflag [#allocation9], %s380
          %s382 = sand.u32 %s130, 1
          %s383 = scalar_lea.vmem [#allocation8], %s382
          %384 = dma.done %s381, 16
        $region60: #{tpu_custom_call.1} parent=51 // pred_fallthru
          _
      $region52: #{tpu_custom_call.1} parent=5 // pred_fallthru
        _
    $region6: #{tpu_custom_call.1} parent=1 // loop_footer
      %s26 = sadd.s32 1, %s22
    $region7: #{tpu_custom_call.1} parent=1 // loop_footer_branch
      %21 = sbr.rel target = $region3
    $region8: #{tpu_custom_call.1} parent=1 // loop_exit
      _
    %385 = vsyncpa [#allocation3], 1
    %s386 = scalar_lea.sflag [#allocation3], 1
    %387 = vsyncpa %s386, 1
    %388 = vsyncpa [#allocation6], 1
    %s389 = scalar_lea.sflag [#allocation6], 1
    %390 = vsyncpa %s389, 1
    %391 = vsyncpa [#allocation4], 1
    %s392 = scalar_lea.sflag [#allocation4], 1
    %393 = vsyncpa %s392, 1
    %394 = vsyncpa [#allocation9], 1
    %s395 = scalar_lea.sflag [#allocation9], 1
    %396 = vsyncpa %s395, 1

</llo_original>
